<compile_context>
chip_gen: v6e
topology: v6e:2x2x1
jax: 0.10.0
libtpu: 0.0.40
codegen_flags: <defaults>
</compile_context>

<pallas_src>
import jax
import jax.numpy as jnp
from jax.experimental import pallas as pl
from jax.experimental.pallas import tpu as pltpu


def _round_up(x, m):
    return ((x + m - 1) // m) * m


# ---------------------------------------------------------------------------
# Kernels
# ---------------------------------------------------------------------------

_STATIC_UNROLL_LIMIT = 64  # full static unroll below this, fori_loop above


def _make_vmem_gather_kernel(tok_block):
    """Fast path: whole table resident in VMEM; gather = vector row loads."""

    def gather_one(ids_ref, w_ref, o_ref, base, t):
        row = ids_ref[base + t]                       # SMEM scalar read
        o_ref[pl.ds(t, 1), :] = w_ref[pl.ds(row, 1), :]

    def kernel(ids_ref, w_ref, o_ref):
        # ids_ref : SMEM (n_pad,) int32   (scalar prefetch)
        # w_ref   : VMEM (V, D_pack)      (whole table, fetched once)
        # o_ref   : VMEM (tok_block, D_pack) pipelined output tile
        base = pl.program_id(0) * tok_block
        if tok_block <= _STATIC_UNROLL_LIMIT:
            for t in range(tok_block):
                gather_one(ids_ref, w_ref, o_ref, base, t)
        else:
            def body(t, carry):
                gather_one(ids_ref, w_ref, o_ref, base, t)
                return carry
            jax.lax.fori_loop(0, tok_block, body, 0, unroll=8)

    return kernel


def _make_hbm_gather_kernel(tok_block):
    """Large-table path: per-row HBM DMAs straight into the output tile."""

    def issue_one(ids_ref, w_hbm, o_ref, sem, base, t):
        row = ids_ref[base + t]
        pltpu.make_async_copy(
            w_hbm.at[pl.ds(row, 1), :],      # dynamic HBM source row
            o_ref.at[pl.ds(t, 1), :],        # straight into the output tile
            sem,                             # single shared DMA semaphore
        ).start()

    def kernel(ids_ref, w_hbm, o_ref, sem):
        # ids_ref : SMEM (n_pad,) int32   (scalar prefetch)
        # w_hbm   : HBM  (V, D_pack)      (memory_space=pl.ANY, manual DMA)
        # o_ref   : VMEM (tok_block, D_pack) pipelined output tile
        # sem     : single DMA semaphore
        base = pl.program_id(0) * tok_block
        if tok_block <= _STATIC_UNROLL_LIMIT:
            for t in range(tok_block):
                issue_one(ids_ref, w_hbm, o_ref, sem, base, t)
        else:
            def body(t, carry):
                issue_one(ids_ref, w_hbm, o_ref, sem, base, t)
                return carry
            jax.lax.fori_loop(0, tok_block, body, 0, unroll=8)

        # Aggregate drain: every row copy signalled `sem` by its byte count;
        # one wait whose descriptor covers the full (tok_block, D_pack) tile
        # consumes exactly the sum of those bytes.  Never .start()ed.
        pltpu.make_async_copy(o_ref, o_ref, sem).wait()

    return kernel


# ---------------------------------------------------------------------------
# Wrapper
# ---------------------------------------------------------------------------

def _maybe_pack_rows_to_u32(weight):
    """Pack sub-32-bit rows into uint32 so row accesses are 32-bit sublane
    transfers.  Returns (kernel_table, elems_per_word, D_pack)."""
    V, D = weight.shape
    itemsize = jnp.dtype(weight.dtype).itemsize
    if itemsize >= 4:
        return weight, 1, D
    per = 4 // itemsize
    if D % per != 0:
        # TODO(synk): odd hidden dim with a sub-32-bit table falls back to the
        # native dtype (strided sub-sublane row accesses).
        return weight, 1, D
    packed = jax.lax.bitcast_convert_type(
        weight.reshape(V, D // per, per), jnp.uint32)
    return packed, per, D // per


def tt_embeddings_forward(
    token_ids,
    weight,
    *,
    tok_block=128,
    table_vmem_limit_bytes=4 * 1024 * 1024,   # fast-path threshold
    out_tile_limit_bytes=2 * 1024 * 1024,     # per output buffer
    vmem_limit_bytes=None,                    # raise scoped VMEM if needed
    force_hbm=False,
):
    """Embedding lookup: token_ids (B, S) int32, weight (V, D) -> (B, S, D)."""
    B, S = token_ids.shape
    V, D = weight.shape
    orig_dtype = weight.dtype
    n_tok = B * S

    # Pack sub-32-bit rows to uint32 for clean 32-bit sublane DMA / loads.
    w_kernel, per, D_pack = _maybe_pack_rows_to_u32(weight)
    row_bytes = D_pack * jnp.dtype(w_kernel.dtype).itemsize

    # Token block: multiple of 8, capped at 256, budgeted so the pipelined
    # (double-buffered) output tile stays <= out_tile_limit_bytes per buffer.
    max_tok_by_vmem = max(8, (out_tile_limit_bytes // max(row_bytes, 1)) // 8 * 8)
    tok_block = max(8, min(256, _round_up(int(tok_block), 8)))
    tok_block = min(tok_block, max_tok_by_vmem, _round_up(n_tok, 8))
    n_pad = _round_up(n_tok, tok_block)

    # Clamp ids so an out-of-range token can never address past the table.
    # (torch nn.Embedding would raise; here we clip, pad tokens fetch row 0.)
    flat_ids = jnp.clip(token_ids.reshape(n_tok).astype(jnp.int32), 0, V - 1)
    if n_pad != n_tok:
        flat_ids = jnp.concatenate(
            [flat_ids, jnp.zeros((n_pad - n_tok,), jnp.int32)])

    table_bytes = V * row_bytes
    use_vmem_table = (not force_hbm) and table_bytes <= table_vmem_limit_bytes

    if use_vmem_table:
        kernel = _make_vmem_gather_kernel(tok_block)
        in_specs = [pl.BlockSpec((V, D_pack), lambda i, ids: (0, 0))]
        scratch_shapes = []
    else:
        kernel = _make_hbm_gather_kernel(tok_block)
        in_specs = [pl.BlockSpec(memory_space=pl.ANY)]   # table stays in HBM
        scratch_shapes = [pltpu.SemaphoreType.DMA]       # one shared DMA sem

    out_specs = pl.BlockSpec((tok_block, D_pack), lambda i, ids: (i, 0))

    cost = pl.CostEstimate(
        flops=0,
        transcendentals=0,
        bytes_accessed=2 * n_pad * row_bytes + 4 * n_pad
        + (table_bytes if use_vmem_table else 0),
    )

    cp_kwargs = dict(
        # Token blocks are independent -> shard the grid across both TCs on
        # v7x (no-op on single-TC v5e/v6e).
        dimension_semantics=("parallel",),
    )
    if vmem_limit_bytes is not None:
        cp_kwargs["vmem_limit_bytes"] = int(vmem_limit_bytes)

    out_k = pl.pallas_call(
        kernel,
        out_shape=jax.ShapeDtypeStruct((n_pad, D_pack), w_kernel.dtype),
        grid_spec=pltpu.PrefetchScalarGridSpec(
            num_scalar_prefetch=1,
            grid=(n_pad // tok_block,),
            in_specs=in_specs,
            out_specs=out_specs,
            scratch_shapes=scratch_shapes,
        ),
        compiler_params=pltpu.CompilerParams(**cp_kwargs),
        cost_estimate=cost,
    )(flat_ids, w_kernel)

    if per > 1:
        out = jax.lax.bitcast_convert_type(out_k, orig_dtype).reshape(n_pad, D)
    else:
        out = out_k
    return out[:n_tok].reshape(B, S, D)


# ---------------------------------------------------------------------------
# Demo / self-check
# ---------------------------------------------------------------------------

if __name__ == "__main__":
    # Small, deterministic synthetic setup consistent with an embedding layer.
    B, S = 2, 8          # batch, sequence
    V, D = 64, 128       # vocab size, hidden size

    key = jax.random.PRNGKey(0)
    k_ids, k_w = jax.random.split(key)

    token_ids = jax.random.randint(k_ids, (B, S), minval=0, maxval=V,
                                   dtype=jnp.int32)
    weight_bf16 = (jax.random.normal(k_w, (V, D), dtype=jnp.float32)
                   * 0.02).astype(jnp.bfloat16)
    weight_f32 = jax.random.normal(k_w, (V, D), dtype=jnp.float32) * 0.02

    # Pure gather -> exact equality against the plain-JAX reference.
    ref_bf16 = weight_bf16[token_ids]
    ref_f32 = weight_f32[token_ids]

    # 1) bf16 table, VMEM-resident fast path (u32-packed rows).
    out_fast = jax.block_until_ready(
        tt_embeddings_forward(token_ids, weight_bf16))
    assert out_fast.shape == (B, S, D) and out_fast.dtype == weight_bf16.dtype
    assert bool(jnp.array_equal(out_fast, ref_bf16)), "fast-path mismatch"

    # 2) bf16 table, forced HBM path (per-row DMAs into the output tile).
    out_hbm = jax.block_until_ready(
        tt_embeddings_forward(token_ids, weight_bf16, force_hbm=True))
    assert bool(jnp.array_equal(out_hbm, ref_bf16)), "hbm-path mismatch"

    # 3) f32 table (unpacked 32-bit path).
    out_f32 = jax.block_until_ready(
        tt_embeddings_forward(token_ids, weight_f32))
    assert bool(jnp.array_equal(out_f32, ref_f32)), "f32-path mismatch"

    print("KERNEL_OK")
</pallas_src>

<mosaic_0001>
module attributes {stable_mosaic.version = 11 : i64} {
  func.func @kernel(%arg0: i32, %arg1: memref<16xi32, #tpu.memory_space<smem>>, %arg2: memref<64x64xi32, #tpu.memory_space<vmem>>, %arg3: memref<16x64xi32, #tpu.memory_space<vmem>>) attributes {dimension_semantics = [#tpu.dimension_semantics<parallel>], iteration_bounds = array<i64: 1>, scalar_prefetch = 1 : i64, scratch_operands = 0 : i64, tpu.core_type = #tpu.core_type<tc>, window_params = [{pipeline_mode = #tpu.pipeline_mode<synchronous>, transform_indices = @transform_0, window_bounds = array<i64: 64, 64>}, {transform_indices = @transform_1, window_bounds = array<i64: 16, 64>}]} {
    %c16_i32 = arith.constant 16 : i32
    %0 = arith.muli %arg0, %c16_i32 : i32
    %c0_i32 = arith.constant 0 : i32
    %1 = arith.addi %0, %c0_i32 : i32
    %2 = arith.index_cast %1 : i32 to index
    %3 = memref.load %arg1[%2] : memref<16xi32, #tpu.memory_space<smem>>
    %4 = arith.index_cast %3 : i32 to index
    %c0 = arith.constant 0 : index
    %5 = vector.load %arg2[%4, %c0] : memref<64x64xi32, #tpu.memory_space<vmem>>, vector<1x64xi32>
    %c0_0 = arith.constant 0 : index
    %c0_1 = arith.constant 0 : index
    %6 = vector.load %arg3[%c0_0, %c0_1] : memref<16x64xi32, #tpu.memory_space<vmem>>, vector<1x64xi32>
    tpu.vector_store %arg3[%c0_0, %c0_1], %5 {strides = array<i32>} : memref<16x64xi32, #tpu.memory_space<vmem>>, vector<1x64xi32>,
    %c1_i32 = arith.constant 1 : i32
    %7 = arith.addi %0, %c1_i32 : i32
    %8 = arith.index_cast %7 : i32 to index
    %9 = memref.load %arg1[%8] : memref<16xi32, #tpu.memory_space<smem>>
    %10 = arith.index_cast %9 : i32 to index
    %c0_2 = arith.constant 0 : index
    %11 = vector.load %arg2[%10, %c0_2] : memref<64x64xi32, #tpu.memory_space<vmem>>, vector<1x64xi32>
    %c1 = arith.constant 1 : index
    %c0_3 = arith.constant 0 : index
    %12 = vector.load %arg3[%c1, %c0_3] : memref<16x64xi32, #tpu.memory_space<vmem>>, vector<1x64xi32>
    tpu.vector_store %arg3[%c1, %c0_3], %11 {strides = array<i32>} : memref<16x64xi32, #tpu.memory_space<vmem>>, vector<1x64xi32>,
    %c2_i32 = arith.constant 2 : i32
    %13 = arith.addi %0, %c2_i32 : i32
    %14 = arith.index_cast %13 : i32 to index
    %15 = memref.load %arg1[%14] : memref<16xi32, #tpu.memory_space<smem>>
    %16 = arith.index_cast %15 : i32 to index
    %c0_4 = arith.constant 0 : index
    %17 = vector.load %arg2[%16, %c0_4] : memref<64x64xi32, #tpu.memory_space<vmem>>, vector<1x64xi32>
    %c2 = arith.constant 2 : index
    %c0_5 = arith.constant 0 : index
    %18 = vector.load %arg3[%c2, %c0_5] : memref<16x64xi32, #tpu.memory_space<vmem>>, vector<1x64xi32>
    tpu.vector_store %arg3[%c2, %c0_5], %17 {strides = array<i32>} : memref<16x64xi32, #tpu.memory_space<vmem>>, vector<1x64xi32>,
    %c3_i32 = arith.constant 3 : i32
    %19 = arith.addi %0, %c3_i32 : i32
    %20 = arith.index_cast %19 : i32 to index
    %21 = memref.load %arg1[%20] : memref<16xi32, #tpu.memory_space<smem>>
    %22 = arith.index_cast %21 : i32 to index
    %c0_6 = arith.constant 0 : index
    %23 = vector.load %arg2[%22, %c0_6] : memref<64x64xi32, #tpu.memory_space<vmem>>, vector<1x64xi32>
    %c3 = arith.constant 3 : index
    %c0_7 = arith.constant 0 : index
    %24 = vector.load %arg3[%c3, %c0_7] : memref<16x64xi32, #tpu.memory_space<vmem>>, vector<1x64xi32>
    tpu.vector_store %arg3[%c3, %c0_7], %23 {strides = array<i32>} : memref<16x64xi32, #tpu.memory_space<vmem>>, vector<1x64xi32>,
    %c4_i32 = arith.constant 4 : i32
    %25 = arith.addi %0, %c4_i32 : i32
    %26 = arith.index_cast %25 : i32 to index
    %27 = memref.load %arg1[%26] : memref<16xi32, #tpu.memory_space<smem>>
    %28 = arith.index_cast %27 : i32 to index
    %c0_8 = arith.constant 0 : index
    %29 = vector.load %arg2[%28, %c0_8] : memref<64x64xi32, #tpu.memory_space<vmem>>, vector<1x64xi32>
    %c4 = arith.constant 4 : index
    %c0_9 = arith.constant 0 : index
    %30 = vector.load %arg3[%c4, %c0_9] : memref<16x64xi32, #tpu.memory_space<vmem>>, vector<1x64xi32>
    tpu.vector_store %arg3[%c4, %c0_9], %29 {strides = array<i32>} : memref<16x64xi32, #tpu.memory_space<vmem>>, vector<1x64xi32>,
    %c5_i32 = arith.constant 5 : i32
    %31 = arith.addi %0, %c5_i32 : i32
    %32 = arith.index_cast %31 : i32 to index
    %33 = memref.load %arg1[%32] : memref<16xi32, #tpu.memory_space<smem>>
    %34 = arith.index_cast %33 : i32 to index
    %c0_10 = arith.constant 0 : index
    %35 = vector.load %arg2[%34, %c0_10] : memref<64x64xi32, #tpu.memory_space<vmem>>, vector<1x64xi32>
    %c5 = arith.constant 5 : index
    %c0_11 = arith.constant 0 : index
    %36 = vector.load %arg3[%c5, %c0_11] : memref<16x64xi32, #tpu.memory_space<vmem>>, vector<1x64xi32>
    tpu.vector_store %arg3[%c5, %c0_11], %35 {strides = array<i32>} : memref<16x64xi32, #tpu.memory_space<vmem>>, vector<1x64xi32>,
    %c6_i32 = arith.constant 6 : i32
    %37 = arith.addi %0, %c6_i32 : i32
    %38 = arith.index_cast %37 : i32 to index
    %39 = memref.load %arg1[%38] : memref<16xi32, #tpu.memory_space<smem>>
    %40 = arith.index_cast %39 : i32 to index
    %c0_12 = arith.constant 0 : index
    %41 = vector.load %arg2[%40, %c0_12] : memref<64x64xi32, #tpu.memory_space<vmem>>, vector<1x64xi32>
    %c6 = arith.constant 6 : index
    %c0_13 = arith.constant 0 : index
    %42 = vector.load %arg3[%c6, %c0_13] : memref<16x64xi32, #tpu.memory_space<vmem>>, vector<1x64xi32>
    tpu.vector_store %arg3[%c6, %c0_13], %41 {strides = array<i32>} : memref<16x64xi32, #tpu.memory_space<vmem>>, vector<1x64xi32>,
    %c7_i32 = arith.constant 7 : i32
    %43 = arith.addi %0, %c7_i32 : i32
    %44 = arith.index_cast %43 : i32 to index
    %45 = memref.load %arg1[%44] : memref<16xi32, #tpu.memory_space<smem>>
    %46 = arith.index_cast %45 : i32 to index
    %c0_14 = arith.constant 0 : index
    %47 = vector.load %arg2[%46, %c0_14] : memref<64x64xi32, #tpu.memory_space<vmem>>, vector<1x64xi32>
    %c7 = arith.constant 7 : index
    %c0_15 = arith.constant 0 : index
    %48 = vector.load %arg3[%c7, %c0_15] : memref<16x64xi32, #tpu.memory_space<vmem>>, vector<1x64xi32>
    tpu.vector_store %arg3[%c7, %c0_15], %47 {strides = array<i32>} : memref<16x64xi32, #tpu.memory_space<vmem>>, vector<1x64xi32>,
    %c8_i32 = arith.constant 8 : i32
    %49 = arith.addi %0, %c8_i32 : i32
    %50 = arith.index_cast %49 : i32 to index
    %51 = memref.load %arg1[%50] : memref<16xi32, #tpu.memory_space<smem>>
    %52 = arith.index_cast %51 : i32 to index
    %c0_16 = arith.constant 0 : index
    %53 = vector.load %arg2[%52, %c0_16] : memref<64x64xi32, #tpu.memory_space<vmem>>, vector<1x64xi32>
    %c8 = arith.constant 8 : index
    %c0_17 = arith.constant 0 : index
    %54 = vector.load %arg3[%c8, %c0_17] : memref<16x64xi32, #tpu.memory_space<vmem>>, vector<1x64xi32>
    tpu.vector_store %arg3[%c8, %c0_17], %53 {strides = array<i32>} : memref<16x64xi32, #tpu.memory_space<vmem>>, vector<1x64xi32>,
    %c9_i32 = arith.constant 9 : i32
    %55 = arith.addi %0, %c9_i32 : i32
    %56 = arith.index_cast %55 : i32 to index
    %57 = memref.load %arg1[%56] : memref<16xi32, #tpu.memory_space<smem>>
    %58 = arith.index_cast %57 : i32 to index
    %c0_18 = arith.constant 0 : index
    %59 = vector.load %arg2[%58, %c0_18] : memref<64x64xi32, #tpu.memory_space<vmem>>, vector<1x64xi32>
    %c9 = arith.constant 9 : index
    %c0_19 = arith.constant 0 : index
    %60 = vector.load %arg3[%c9, %c0_19] : memref<16x64xi32, #tpu.memory_space<vmem>>, vector<1x64xi32>
    tpu.vector_store %arg3[%c9, %c0_19], %59 {strides = array<i32>} : memref<16x64xi32, #tpu.memory_space<vmem>>, vector<1x64xi32>,
    %c10_i32 = arith.constant 10 : i32
    %61 = arith.addi %0, %c10_i32 : i32
    %62 = arith.index_cast %61 : i32 to index
    %63 = memref.load %arg1[%62] : memref<16xi32, #tpu.memory_space<smem>>
    %64 = arith.index_cast %63 : i32 to index
    %c0_20 = arith.constant 0 : index
    %65 = vector.load %arg2[%64, %c0_20] : memref<64x64xi32, #tpu.memory_space<vmem>>, vector<1x64xi32>
    %c10 = arith.constant 10 : index
    %c0_21 = arith.constant 0 : index
    %66 = vector.load %arg3[%c10, %c0_21] : memref<16x64xi32, #tpu.memory_space<vmem>>, vector<1x64xi32>
    tpu.vector_store %arg3[%c10, %c0_21], %65 {strides = array<i32>} : memref<16x64xi32, #tpu.memory_space<vmem>>, vector<1x64xi32>,
    %c11_i32 = arith.constant 11 : i32
    %67 = arith.addi %0, %c11_i32 : i32
    %68 = arith.index_cast %67 : i32 to index
    %69 = memref.load %arg1[%68] : memref<16xi32, #tpu.memory_space<smem>>
    %70 = arith.index_cast %69 : i32 to index
    %c0_22 = arith.constant 0 : index
    %71 = vector.load %arg2[%70, %c0_22] : memref<64x64xi32, #tpu.memory_space<vmem>>, vector<1x64xi32>
    %c11 = arith.constant 11 : index
    %c0_23 = arith.constant 0 : index
    %72 = vector.load %arg3[%c11, %c0_23] : memref<16x64xi32, #tpu.memory_space<vmem>>, vector<1x64xi32>
    tpu.vector_store %arg3[%c11, %c0_23], %71 {strides = array<i32>} : memref<16x64xi32, #tpu.memory_space<vmem>>, vector<1x64xi32>,
    %c12_i32 = arith.constant 12 : i32
    %73 = arith.addi %0, %c12_i32 : i32
    %74 = arith.index_cast %73 : i32 to index
    %75 = memref.load %arg1[%74] : memref<16xi32, #tpu.memory_space<smem>>
    %76 = arith.index_cast %75 : i32 to index
    %c0_24 = arith.constant 0 : index
    %77 = vector.load %arg2[%76, %c0_24] : memref<64x64xi32, #tpu.memory_space<vmem>>, vector<1x64xi32>
    %c12 = arith.constant 12 : index
    %c0_25 = arith.constant 0 : index
    %78 = vector.load %arg3[%c12, %c0_25] : memref<16x64xi32, #tpu.memory_space<vmem>>, vector<1x64xi32>
    tpu.vector_store %arg3[%c12, %c0_25], %77 {strides = array<i32>} : memref<16x64xi32, #tpu.memory_space<vmem>>, vector<1x64xi32>,
    %c13_i32 = arith.constant 13 : i32
    %79 = arith.addi %0, %c13_i32 : i32
    %80 = arith.index_cast %79 : i32 to index
    %81 = memref.load %arg1[%80] : memref<16xi32, #tpu.memory_space<smem>>
    %82 = arith.index_cast %81 : i32 to index
    %c0_26 = arith.constant 0 : index
    %83 = vector.load %arg2[%82, %c0_26] : memref<64x64xi32, #tpu.memory_space<vmem>>, vector<1x64xi32>
    %c13 = arith.constant 13 : index
    %c0_27 = arith.constant 0 : index
    %84 = vector.load %arg3[%c13, %c0_27] : memref<16x64xi32, #tpu.memory_space<vmem>>, vector<1x64xi32>
    tpu.vector_store %arg3[%c13, %c0_27], %83 {strides = array<i32>} : memref<16x64xi32, #tpu.memory_space<vmem>>, vector<1x64xi32>,
    %c14_i32 = arith.constant 14 : i32
    %85 = arith.addi %0, %c14_i32 : i32
    %86 = arith.index_cast %85 : i32 to index
    %87 = memref.load %arg1[%86] : memref<16xi32, #tpu.memory_space<smem>>
    %88 = arith.index_cast %87 : i32 to index
    %c0_28 = arith.constant 0 : index
    %89 = vector.load %arg2[%88, %c0_28] : memref<64x64xi32, #tpu.memory_space<vmem>>, vector<1x64xi32>
    %c14 = arith.constant 14 : index
    %c0_29 = arith.constant 0 : index
    %90 = vector.load %arg3[%c14, %c0_29] : memref<16x64xi32, #tpu.memory_space<vmem>>, vector<1x64xi32>
    tpu.vector_store %arg3[%c14, %c0_29], %89 {strides = array<i32>} : memref<16x64xi32, #tpu.memory_space<vmem>>, vector<1x64xi32>,
    %c15_i32 = arith.constant 15 : i32
    %91 = arith.addi %0, %c15_i32 : i32
    %92 = arith.index_cast %91 : i32 to index
    %93 = memref.load %arg1[%92] : memref<16xi32, #tpu.memory_space<smem>>
    %94 = arith.index_cast %93 : i32 to index
    %c0_30 = arith.constant 0 : index
    %95 = vector.load %arg2[%94, %c0_30] : memref<64x64xi32, #tpu.memory_space<vmem>>, vector<1x64xi32>
    %c15 = arith.constant 15 : index
    %c0_31 = arith.constant 0 : index
    %96 = vector.load %arg3[%c15, %c0_31] : memref<16x64xi32, #tpu.memory_space<vmem>>, vector<1x64xi32>
    tpu.vector_store %arg3[%c15, %c0_31], %95 {strides = array<i32>} : memref<16x64xi32, #tpu.memory_space<vmem>>, vector<1x64xi32>,
    return
  }
  func.func @transform_0(%arg0: i32, %arg1: memref<16xi32, #tpu.memory_space<smem>>) -> (i32, i32) {
    %c0_i32 = arith.constant 0 : i32
    %c0_i32_0 = arith.constant 0 : i32
    %c0_i32_1 = arith.constant 0 : i32
    return %c0_i32, %c0_i32_0 : i32, i32
  }
  func.func @transform_1(%arg0: i32, %arg1: memref<16xi32, #tpu.memory_space<smem>>) -> (i32, i32) {
    %c0_i32 = arith.constant 0 : i32
    %c0_i32_0 = arith.constant 0 : i32
    return %arg0, %c0_i32 : i32, i32
  }
}

</mosaic_0001>

<llo_original>
// kernel: tpu_custom_call.1
$region0: #{tpu_custom_call.1}
  #allocation0 [shape = 'u32[]', space=smem, size = 0x4, offset = 0x4, fixed_abs, tag = 'smem constant byte address 0x4 - core index']
  #allocation1 [shape = 'u32[144,128]{1,0:T(1,128)}', space=vmem, size = 0x12000, scoped, tag = 'internal scratch']
  #allocation2 [shape = 's32[1]{0}', space=sflag, size = 0x4, scoped, tag = 'scoped memory for tpu_custom_call.1']
  #allocation3 [shape = 'u8[512]{0}', space=smem, size = 0x200, scoped, tag = 'prefetched SMEM operand 0']
  %s0 = inlined_call_operand.hbm [shape: s32[16], index: 0, kind: input, shape index: {}]
  %s1 = inlined_call_operand.hbm [shape: u32[64,64], index: 1, kind: input, shape index: {}]
  %s2 = inlined_call_operand.hbm [shape: u32[16,64], index: 2, kind: output, shape index: {}]
  %s3 = sld [smem:[#allocation0]]
  $region18: #{tpu_custom_call.1} parent=0
    _
  %s5 = ssub.s32 1, %s3
  %s6 = scalar_select 0, %s5, %s3
  %8 = dma.hbm_to_smem %s0, 16, [#allocation3], [#allocation2]
  %9 = dma.done [#allocation2], 16
  %10 = sfence
  $region1: #{tpu_custom_call.1} parent=0
    #allocation4 [shape = 'u8[32768]{0}', space=vmem, size = 0x8000, scoped, tag = 'input window, operand 1, single buffered']
    #allocation5 [shape = 's32[1]{0}', space=sflag, size = 0x4, scoped, tag = 'scoped memory for tpu_custom_call.1']
    #allocation6 [shape = 's32[1]{0}', space=sflag, size = 0x4, scoped, tag = 'scoped memory for tpu_custom_call.1']
    #allocation7 [shape = 'u8[8192]{0}', space=vmem, size = 0x2000, scoped, tag = 'output window, operand 0, single buffered']
    %11 = vsyncpa [#allocation5], 0
    %12 = vsyncpa [#allocation6], 0
    // Predicated region
    $region2: #{tpu_custom_call.1} parent=1 // pred_check
      _
    $region3: #{tpu_custom_call.1} parent=1 // pred_check_branch
      %14 = sbr.rel (0) target = $region5
    $region4: #{tpu_custom_call.1} parent=1 // pred_region
      %s16 = ssub.s32 1024, 1024
      %17 = vsyncadd [#allocation5], %s16
      %s18 = sshll.u32 [#allocation4], 4
      %s19 = int_to_ptr.vmem [resolvable:$true] %s18
      %24 = dma.hbm_to_vmem [thread:$0]  %s1, 1024, %s19, [#allocation5], 128, 128, 8
    $region5: #{tpu_custom_call.1} parent=1 // pred_fallthru
      _
    // Predicated region
    $region6: #{tpu_custom_call.1} parent=1 // pred_check
      _
    $region7: #{tpu_custom_call.1} parent=1 // pred_check_branch
      %26 = sbr.rel (0) target = $region9
    $region8: #{tpu_custom_call.1} parent=1 // pred_region
      %27 = dma.done [#allocation5], 1024
    $region9: #{tpu_custom_call.1} parent=1 // pred_fallthru
      _
    %s28 = smul.u32 0, 16
    %s29 = sld [smem:[#allocation3 + %s28]]
    %s30 = scalar_lea.vmem [#allocation4], %s29
    %v31 = vld [vmem:[%s30] sm:$0x1]
    %vm32 = vcmask 516096
    %33 = vst.msk [vmem:[#allocation7] sm:$0x1] %vm32, %v31
    %s34 = sadd.s32 %s28, 1
    %s35 = sld [smem:[#allocation3 + %s34]]
    %s36 = scalar_lea.vmem [#allocation4], %s35
    %v37 = vld [vmem:[%s36] sm:$0x1]
    %38 = vst.msk [vmem:[#allocation7 + $0x1] sm:$0x1] %vm32, %v37
    %s39 = sadd.s32 %s28, 2
    %s40 = sld [smem:[#allocation3 + %s39]]
    %s41 = scalar_lea.vmem [#allocation4], %s40
    %v42 = vld [vmem:[%s41] sm:$0x1]
    %43 = vst.msk [vmem:[#allocation7 + $0x2] sm:$0x1] %vm32, %v42
    %s44 = sadd.s32 %s28, 3
    %s45 = sld [smem:[#allocation3 + %s44]]
    %s46 = scalar_lea.vmem [#allocation4], %s45
    %v47 = vld [vmem:[%s46] sm:$0x1]
    %48 = vst.msk [vmem:[#allocation7 + $0x3] sm:$0x1] %vm32, %v47
    %s49 = sadd.s32 %s28, 4
    %s50 = sld [smem:[#allocation3 + %s49]]
    %s51 = scalar_lea.vmem [#allocation4], %s50
    %v52 = vld [vmem:[%s51] sm:$0x1]
    %53 = vst.msk [vmem:[#allocation7 + $0x4] sm:$0x1] %vm32, %v52
    %s54 = sadd.s32 %s28, 5
    %s55 = sld [smem:[#allocation3 + %s54]]
    %s56 = scalar_lea.vmem [#allocation4], %s55
    %v57 = vld [vmem:[%s56] sm:$0x1]
    %58 = vst.msk [vmem:[#allocation7 + $0x5] sm:$0x1] %vm32, %v57
    %s59 = sadd.s32 %s28, 6
    %s60 = sld [smem:[#allocation3 + %s59]]
    %s61 = scalar_lea.vmem [#allocation4], %s60
    %v62 = vld [vmem:[%s61] sm:$0x1]
    %63 = vst.msk [vmem:[#allocation7 + $0x6] sm:$0x1] %vm32, %v62
    %s64 = sadd.s32 %s28, 7
    %s65 = sld [smem:[#allocation3 + %s64]]
    %s66 = scalar_lea.vmem [#allocation4], %s65
    %v67 = vld [vmem:[%s66] sm:$0x1]
    %68 = vst.msk [vmem:[#allocation7 + $0x7] sm:$0x1] %vm32, %v67
    %s69 = sadd.s32 %s28, 8
    %s70 = sld [smem:[#allocation3 + %s69]]
    %s71 = scalar_lea.vmem [#allocation4], %s70
    %v72 = vld [vmem:[%s71] sm:$0x1]
    %73 = vst.msk [vmem:[#allocation7 + $0x8] sm:$0x1] %vm32, %v72
    %s74 = sadd.s32 %s28, 9
    %s75 = sld [smem:[#allocation3 + %s74]]
    %s76 = scalar_lea.vmem [#allocation4], %s75
    %v77 = vld [vmem:[%s76] sm:$0x1]
    %78 = vst.msk [vmem:[#allocation7 + $0x9] sm:$0x1] %vm32, %v77
    %s79 = sadd.s32 %s28, 10
    %s80 = sld [smem:[#allocation3 + %s79]]
    %s81 = scalar_lea.vmem [#allocation4], %s80
    %v82 = vld [vmem:[%s81] sm:$0x1]
    %83 = vst.msk [vmem:[#allocation7 + $0xa] sm:$0x1] %vm32, %v82
    %s84 = sadd.s32 %s28, 11
    %s85 = sld [smem:[#allocation3 + %s84]]
    %s86 = scalar_lea.vmem [#allocation4], %s85
    %v87 = vld [vmem:[%s86] sm:$0x1]
    %88 = vst.msk [vmem:[#allocation7 + $0xb] sm:$0x1] %vm32, %v87
    %s89 = sadd.s32 %s28, 12
    %s90 = sld [smem:[#allocation3 + %s89]]
    %s91 = scalar_lea.vmem [#allocation4], %s90
    %v92 = vld [vmem:[%s91] sm:$0x1]
    %93 = vst.msk [vmem:[#allocation7 + $0xc] sm:$0x1] %vm32, %v92
    %s94 = sadd.s32 %s28, 13
    %s95 = sld [smem:[#allocation3 + %s94]]
    %s96 = scalar_lea.vmem [#allocation4], %s95
    %v97 = vld [vmem:[%s96] sm:$0x1]
    %98 = vst.msk [vmem:[#allocation7 + $0xd] sm:$0x1] %vm32, %v97
    %s99 = sadd.s32 %s28, 14
    %s100 = sld [smem:[#allocation3 + %s99]]
    %s101 = scalar_lea.vmem [#allocation4], %s100
    %v102 = vld [vmem:[%s101] sm:$0x1]
    %103 = vst.msk [vmem:[#allocation7 + $0xe] sm:$0x1] %vm32, %v102
    %s104 = sadd.s32 %s28, 15
    %s105 = sld [smem:[#allocation3 + %s104]]
    %s106 = scalar_lea.vmem [#allocation4], %s105
    %v107 = vld [vmem:[%s106] sm:$0x1]
    %108 = vst.msk [vmem:[#allocation7 + $0xf] sm:$0x1] %vm32, %v107
    // Predicated region
    $region10: #{tpu_custom_call.1} parent=1 // pred_check
      _
    $region11: #{tpu_custom_call.1} parent=1 // pred_check_branch
      %110 = sbr.rel (0) target = $region13
    $region12: #{tpu_custom_call.1} parent=1 // pred_region
      %s112 = ssub.s32 256, 256
      %113 = vsyncadd [#allocation6], %s112
      %s114 = sshll.u32 [#allocation7], 4
      %s115 = int_to_ptr.vmem [resolvable:$true] %s114
      %120 = dma.vmem_to_hbm [thread:$0]  %s115, 256, %s2, [#allocation6], 128, 128, 8
    $region13: #{tpu_custom_call.1} parent=1 // pred_fallthru
      _
    // Predicated region
    $region14: #{tpu_custom_call.1} parent=1 // pred_check
      _
    $region15: #{tpu_custom_call.1} parent=1 // pred_check_branch
      %122 = sbr.rel (0) target = $region17
    $region16: #{tpu_custom_call.1} parent=1 // pred_region
      %123 = dma.done [#allocation6], 256
    $region17: #{tpu_custom_call.1} parent=1 // pred_fallthru
      _
    %124 = vsyncpa [#allocation5], 1
    %125 = vsyncpa [#allocation6], 1

</llo_original>
